<compile_context>
chip_gen: v6e
topology: v6e:2x2x1
jax: 0.10.0
libtpu: 0.0.40
codegen_flags: <defaults>
</compile_context>

<pallas_src>
import functools

import jax
import jax.numpy as jnp
from jax import lax
from jax.experimental import pallas as pl
from jax.experimental.pallas import tpu as pltpu


def _choose_tile_n(n: int, c: int, itemsize: int) -> int:
    """Pick the batch (row) tile.

    Targets ~8 MiB of logits per DMA buffer (mem-bound tiling on v6e reaches
    ~85% of HBM roofline at 512+-row-equivalent tiles) while keeping the VMEM
    working set (double-buffered input + ~2 full-tile f32 temps) under ~36 MiB
    so it fits v7x's 64 MiB/TC with headroom.
    """
    target_logits_bytes = 8 << 20
    vmem_working_cap = 36 << 20
    per_row_bytes = c * (2 * itemsize + 2 * 4)   # 2x input buf + 2x f32 temp

    tn = min(target_logits_bytes // max(1, c * itemsize),
             vmem_working_cap // max(1, per_row_bytes))

    row_align = 8 if itemsize >= 4 else 16       # sublane packing (bf16 -> 16)
    tn = max(row_align, (tn // row_align) * row_align)

    n_align = -(-n // row_align) * row_align
    tn = min(tn, n_align)

    # Prefer >= 2 grid steps for non-trivial batches so the "parallel" axis
    # can megacore-shard on v7x (a single tile idles the second TensorCore).
    if tn >= n_align and n_align > row_align:
        half = -(-(n_align // 2) // row_align) * row_align
        tn = max(row_align, half)
    return tn


def _vmem_limit_bytes(tile_n: int, c: int, itemsize: int) -> int:
    """Explicit scoped-VMEM budget (defaults: ~16 MiB v5e / ~32 MiB v6e+)."""
    in_buf = 2 * tile_n * c * itemsize      # double-buffered logits tile
    tgt_buf = 2 * tile_n * 4                # double-buffered targets tile
    f32_tmp = 2 * tile_n * c * 4            # headroom for the f32 exp chain
    slack = 2 << 20
    budget = in_buf + tgt_buf + f32_tmp + slack
    # Never below the old defaults, never above ~48 MiB (v7x: 64 MiB per TC).
    return int(min(max(budget, 16 << 20), 48 << 20))


def _ce_partial_kernel(logits_ref, targets_ref, out_ref, *, tile_n, n_valid):
    # logits_ref: (TN, C) input dtype; targets_ref: (TN, 1) int32;
    # out_ref: (1, 1) f32 in SMEM -> per-tile partial sum of NLL.
    i = pl.program_id(0)

    x = logits_ref[...]                                    # (TN, C) input dtype
    tgt = targets_ref[...]                                 # (TN, 1) int32
    col = lax.broadcasted_iota(jnp.int32, x.shape, 1)      # (TN, C)

    # Row max in the input dtype (exact for bf16; halves VALU work on v6e/v7x
    # and avoids a long-lived full-tile f32 copy).
    m = jnp.max(x, axis=-1, keepdims=True)                 # (TN, 1)

    # Target logit: exactly one nonzero per row, so the input-dtype sum is
    # exact; no f32 one-hot temporary.
    tgt_logit = jnp.sum(
        jnp.where(col == tgt, x, 0), axis=-1, keepdims=True
    ).astype(jnp.float32)                                  # (TN, 1)

    # Numerically stable logsumexp: upcast lazily inside the exp chain (the
    # f32 values stream through vregs into the reduction).
    shifted = x.astype(jnp.float32) - m.astype(jnp.float32)        # (TN, C)
    sumexp = jnp.sum(jnp.exp(shifted), axis=-1, keepdims=True)     # (TN, 1)
    lse = m.astype(jnp.float32) + jnp.log(sumexp)                  # (TN, 1)

    per_row_nll = lse - tgt_logit                                  # (TN, 1)

    # Mask the ragged tail: rows >= n_valid come from the unpadded last block
    # and may hold garbage / inf / NaN -- the select discards it exactly.
    row = i * tile_n + lax.broadcasted_iota(jnp.int32, (tile_n, 1), 0)
    per_row_nll = jnp.where(row < n_valid, per_row_nll, 0.0)

    out_ref[0, 0] = jnp.sum(per_row_nll)


def cross_entropy_loss(logits: jax.Array, targets: jax.Array, *, tile_n=None) -> jax.Array:
    """logits: (N, C) float (f32 or bf16); targets: (N,) integer class indices.

    Returns the scalar mean cross-entropy loss in float32
    (== torch.nn.CrossEntropyLoss()(logits, targets)).
    """
    n, c = logits.shape
    itemsize = jnp.dtype(logits.dtype).itemsize
    if tile_n is None:
        tile_n = _choose_tile_n(n, c, itemsize)

    grid_n = pl.cdiv(n, tile_n)
    tgt2d = targets.astype(jnp.int32).reshape(n, 1)

    kernel = functools.partial(_ce_partial_kernel, tile_n=tile_n, n_valid=n)

    partials = pl.pallas_call(
        kernel,
        out_shape=jax.ShapeDtypeStruct((grid_n, 1), jnp.float32),
        grid_spec=pltpu.PrefetchScalarGridSpec(
            num_scalar_prefetch=0,
            grid=(grid_n,),
            in_specs=[
                pl.BlockSpec((tile_n, c), lambda i: (i, 0)),
                pl.BlockSpec((tile_n, 1), lambda i: (i, 0)),
            ],
            out_specs=pl.BlockSpec(
                (1, 1), lambda i: (i, 0), memory_space=pltpu.SMEM
            ),
        ),
        compiler_params=pltpu.CompilerParams(
            dimension_semantics=("parallel",),
            vmem_limit_bytes=_vmem_limit_bytes(tile_n, c, itemsize),
        ),
        cost_estimate=pl.CostEstimate(
            flops=5 * n * c,
            transcendentals=n * c + n,
            bytes_accessed=n * c * itemsize + n * 4 + grid_n * 4,
        ),
    )(logits, tgt2d)

    # Tiny final reduction + mean over the true N, outside the kernel.
    return jnp.sum(partials) / jnp.float32(n)


def _ref_loss(logits_f32, targets):
    return jnp.mean(
        jax.nn.logsumexp(logits_f32, axis=-1)
        - jnp.take_along_axis(logits_f32, targets[:, None], axis=-1)[:, 0]
    )


if __name__ == "__main__":
    key = jax.random.PRNGKey(0)
    k1, k2, k3, k4, k5, k6 = jax.random.split(key, 6)

    # Test 1: tiny f32 problem (single full tile, no ragged rows).
    N, C = 8, 32
    logits = jax.random.normal(k1, (N, C), dtype=jnp.float32)
    targets = jax.random.randint(k2, (N,), 0, C, dtype=jnp.int32)

    loss = jax.block_until_ready(cross_entropy_loss(logits, targets))
    ref = _ref_loss(logits, targets)
    assert jnp.allclose(loss, ref, atol=1e-5, rtol=1e-5), (loss, ref)

    # Test 2: bf16 logits, auto tile, ragged N (no jnp.pad; last block partial).
    N2, C2 = 200, 512
    logits2 = jax.random.normal(k3, (N2, C2), dtype=jnp.bfloat16)
    targets2 = jax.random.randint(k4, (N2,), 0, C2, dtype=jnp.int32)

    loss2 = jax.block_until_ready(cross_entropy_loss(logits2, targets2))
    ref2 = _ref_loss(logits2.astype(jnp.float32), targets2)
    assert jnp.allclose(loss2, ref2, atol=1e-4, rtol=1e-4), (loss2, ref2)

    # Test 3: f32, explicit small tile -> several grid steps + ragged tail.
    N3, C3 = 50, 128
    logits3 = jax.random.normal(k5, (N3, C3), dtype=jnp.float32)
    targets3 = jax.random.randint(k6, (N3,), 0, C3, dtype=jnp.int32)

    loss3 = jax.block_until_ready(cross_entropy_loss(logits3, targets3, tile_n=16))
    ref3 = _ref_loss(logits3, targets3)
    assert jnp.allclose(loss3, ref3, atol=1e-5, rtol=1e-5), (loss3, ref3)

    print("KERNEL_OK")
</pallas_src>

<mosaic_0001>
module attributes {stable_mosaic.version = 11 : i64} {
  func.func @_ce_partial_kernel(%arg0: i32, %arg1: memref<8x32xf32, #tpu.memory_space<vmem>>, %arg2: memref<8x1xi32, #tpu.memory_space<vmem>>, %arg3: memref<1x1xf32, #tpu.memory_space<smem>>) attributes {dimension_semantics = [#tpu.dimension_semantics<parallel>], iteration_bounds = array<i64: 1>, scalar_prefetch = 0 : i64, scratch_operands = 0 : i64, tpu.core_type = #tpu.core_type<tc>, window_params = [{transform_indices = @transform_0, window_bounds = array<i64: 8, 32>}, {transform_indices = @transform_1, window_bounds = array<i64: 8, 1>}, {transform_indices = @transform_2, window_bounds = array<i64: 1, 1>}]} {
    %c0 = arith.constant 0 : index
    %c0_0 = arith.constant 0 : index
    %0 = vector.load %arg1[%c0, %c0_0] : memref<8x32xf32, #tpu.memory_space<vmem>>, vector<8x32xf32>
    %c0_1 = arith.constant 0 : index
    %c0_2 = arith.constant 0 : index
    %1 = vector.load %arg2[%c0_1, %c0_2] : memref<8x1xi32, #tpu.memory_space<vmem>>, vector<8x1xi32>
    %2 = tpu.iota {dimensions = array<i32: 1>} : vector<8x32xi32>
    %cst = arith.constant dense<0xFF800000> : vector<8xf32>
    %3 = vector.multi_reduction <maximumf>, %0, %cst [1] : vector<8x32xf32> to vector<8xf32>
    %4 = vector.shape_cast %3 : vector<8xf32> to vector<8x1xf32>
    %5 = vector.broadcast %1 : vector<8x1xi32> to vector<8x32xi32>
    %6 = arith.cmpi eq, %2, %5 : vector<8x32xi32>
    %c0_i32 = arith.constant 0 : i32
    %7 = arith.sitofp %c0_i32 : i32 to f32
    %8 = vector.broadcast %7 : f32 to vector<8x32xf32>
    %9 = arith.select %6, %0, %8 : vector<8x32xi1>, vector<8x32xf32>
    %cst_3 = arith.constant dense<0.000000e+00> : vector<8xf32>
    %10 = vector.multi_reduction <add>, %9, %cst_3 [1] : vector<8x32xf32> to vector<8xf32>
    %11 = vector.shape_cast %10 : vector<8xf32> to vector<8x1xf32>
    %12 = vector.broadcast %4 : vector<8x1xf32> to vector<8x32xf32>
    %13 = arith.subf %0, %12 : vector<8x32xf32>
    %14 = math.exp %13 : vector<8x32xf32>
    %cst_4 = arith.constant dense<0.000000e+00> : vector<8xf32>
    %15 = vector.multi_reduction <add>, %14, %cst_4 [1] : vector<8x32xf32> to vector<8xf32>
    %16 = vector.shape_cast %15 : vector<8xf32> to vector<8x1xf32>
    %17 = math.log %16 : vector<8x1xf32>
    %18 = arith.addf %4, %17 : vector<8x1xf32>
    %19 = arith.subf %18, %11 : vector<8x1xf32>
    %c8_i32 = arith.constant 8 : i32
    %20 = arith.muli %arg0, %c8_i32 : i32
    %21 = tpu.iota {dimensions = array<i32: 0>} : vector<8x1xi32>
    %22 = vector.broadcast %20 : i32 to vector<8x1xi32>
    %23 = arith.addi %22, %21 : vector<8x1xi32>
    %c8_i32_5 = arith.constant 8 : i32
    %24 = vector.broadcast %c8_i32_5 : i32 to vector<8x1xi32>
    %25 = arith.cmpi slt, %23, %24 : vector<8x1xi32>
    %cst_6 = arith.constant 0.000000e+00 : f32
    %26 = vector.broadcast %cst_6 : f32 to vector<8x1xf32>
    %27 = arith.select %25, %19, %26 : vector<8x1xi1>, vector<8x1xf32>
    %28 = vector.shape_cast %27 : vector<8x1xf32> to vector<1x8x1xf32>
    %cst_7 = arith.constant dense<0.000000e+00> : vector<1xf32>
    %29 = vector.multi_reduction <add>, %28, %cst_7 [1, 2] : vector<1x8x1xf32> to vector<1xf32>
    %30 = vector.shape_cast %29 : vector<1xf32> to vector<1x1x1xf32>
    %31 = vector.extract %30[0, 0, 0] : f32 from vector<1x1x1xf32>
    %c0_8 = arith.constant 0 : index
    %c0_9 = arith.constant 0 : index
    %32 = memref.load %arg3[%c0_8, %c0_9] : memref<1x1xf32, #tpu.memory_space<smem>>
    memref.store %31, %arg3[%c0_8, %c0_9] : memref<1x1xf32, #tpu.memory_space<smem>>
    return
  }
  func.func @transform_0(%arg0: i32) -> (i32, i32) {
    %c0_i32 = arith.constant 0 : i32
    %c0_i32_0 = arith.constant 0 : i32
    return %arg0, %c0_i32 : i32, i32
  }
  func.func @transform_1(%arg0: i32) -> (i32, i32) {
    %c0_i32 = arith.constant 0 : i32
    %c0_i32_0 = arith.constant 0 : i32
    return %arg0, %c0_i32 : i32, i32
  }
  func.func @transform_2(%arg0: i32) -> (i32, i32) {
    %c0_i32 = arith.constant 0 : i32
    %c0_i32_0 = arith.constant 0 : i32
    return %arg0, %c0_i32 : i32, i32
  }
}

</mosaic_0001>

<llo_original>
// kernel: tpu_custom_call.1
$region0: #{tpu_custom_call.1}
  #allocation0 [shape = 'u32[]', space=smem, size = 0x4, offset = 0x4, fixed_abs, tag = 'smem constant byte address 0x4 - core index']
  #allocation1 [shape = 'u32[144,128]{1,0:T(1,128)}', space=vmem, size = 0x12000, scoped, tag = 'internal scratch']
  %s0 = inlined_call_operand.vmem [shape: f32[8,32], index: 0, kind: input, shape index: {}]
  %s1 = inlined_call_operand.vmem [shape: s32[8,1], index: 1, kind: input, shape index: {}]
  %s2 = inlined_call_operand.hbm [shape: f32[1,1], index: 2, kind: output, shape index: {}]
  %s3 = sld [smem:[#allocation0]]
  $region18: #{tpu_custom_call.1} parent=0
    _
  %s5 = ssub.s32 1, %s3
  %s6 = scalar_select 0, %s5, %s3
  $region1: #{tpu_custom_call.1} parent=0
    #allocation2 [shape = 'u8[512]{0}', space=smem, size = 0x200, scoped, tag = 'output window, operand 0, single buffered']
    #allocation3 [shape = 's32[1]{0}', space=sflag, size = 0x4, scoped, tag = 'scoped memory for tpu_custom_call.1']
    %7 = vsyncpa [#allocation3], 0
    // Predicated region
    $region2: #{tpu_custom_call.1} parent=1 // pred_check
      _
    $region3: #{tpu_custom_call.1} parent=1 // pred_check_branch
      %9 = sbr.rel (0) target = $region5
    $region4: #{tpu_custom_call.1} parent=1 // pred_region
      _
    $region5: #{tpu_custom_call.1} parent=1 // pred_fallthru
      _
    // Predicated region
    $region6: #{tpu_custom_call.1} parent=1 // pred_check
      _
    $region7: #{tpu_custom_call.1} parent=1 // pred_check_branch
      %11 = sbr.rel (0) target = $region9
    $region8: #{tpu_custom_call.1} parent=1 // pred_region
      _
    $region9: #{tpu_custom_call.1} parent=1 // pred_fallthru
      _
    %v12 = vld [vmem:[%s0] sm:$0xff]
    %v13 = vld [vmem:[%s1] sm:$0xff]
    %v14 = vlaneseq
    %v15 = vand.u32 %v14, 127
    %vm16 = vcmask 261120
    %v17 = vsel %vm16, %v12, -inf
    %18 = vmax.xlane.f32.xlu0 %v17
    %v19 = vpop.xlane.xlu0 %18
    %20 = vset.pattern.permute.xlu0 0
    %21 = vperm.xlu0 %20, %v13
    %v22 = vpop.permute.xlu0 %21
    %vm23 = vcmp.eq.s32.totalorder %v15, %v22
    %v24 = vsel %vm23, %v12, 0.0
    %v25 = vsel %vm16, %v24, 0.0
    %26 = vadd.xlane.f32.xlu0 %v25
    %v27 = vpop.xlane.xlu0 %26
    %v28 = vsub.f32 %v12, %v19
    %v29 = vmul.f32 %v28, 1.442695
    %v30 = vpow.pop %v29
    %v31 = vsel %vm16, %v30, 0.0
    %32 = vadd.xlane.f32.xlu0 %v31
    %v33 = vpop.xlane.xlu0 %32
    %v34 = vlog2.pop %v33
    %v35 = vmul.f32 %v34, 0.6931472
    %v36 = vadd.f32 %v19, %v35
    %v37 = vsub.f32 %v36, %v27
    %s38 = smul.u32 0, 8
    %v39 = vlaneseq
    %v40 = vshrl.u32 %v39, 7
    %v41 = vstv %s38
    %v42 = vadd.s32 %v41, %v40
    %vm43 = vcmp.lt.s32.totalorder %v42, 8
    %v44 = vsel %vm43, %v37, 0.0
    %vm45 = vcmask 7168
    %v46 = vsel %vm45, %v44, 0.0
    %47 = vadd.xlane.f32.xlu0 %v46
    %v48 = vpop.xlane.xlu0 %47
    %v49 = vrot.slane %v48, 4
    %v50 = vadd.f32 %v48, %v49
    %v51 = vrot.slane %v50, 2
    %v52 = vadd.f32 %v50, %v51
    %v53 = vrot.slane %v52, 1
    %v54 = vadd.f32 %v52, %v53
    %s55 = vtos %v54
    %s56 = scalar_lea.smem [#allocation2], 0
    %57 = sst [smem:[%s56]] %s55
    // Predicated region
    $region10: #{tpu_custom_call.1} parent=1 // pred_check
      _
    $region11: #{tpu_custom_call.1} parent=1 // pred_check_branch
      %59 = sbr.rel (0) target = $region13
    $region12: #{tpu_custom_call.1} parent=1 // pred_region
      %s61 = ssub.s32 16, 16
      %62 = vsyncadd [#allocation3], %s61
      %65 = dma.smem_to_hbm [#allocation2], 16, %s2, [#allocation3]
    $region13: #{tpu_custom_call.1} parent=1 // pred_fallthru
      _
    // Predicated region
    $region14: #{tpu_custom_call.1} parent=1 // pred_check
      _
    $region15: #{tpu_custom_call.1} parent=1 // pred_check_branch
      %67 = sbr.rel (0) target = $region17
    $region16: #{tpu_custom_call.1} parent=1 // pred_region
      %68 = dma.done [#allocation3], 16
    $region17: #{tpu_custom_call.1} parent=1 // pred_fallthru
      _
    %69 = sfence
    %70 = vsyncpa [#allocation3], 1

</llo_original>
